<compile_context>
chip_gen: v7x
topology: tpu7x:2x2x1
jax: 0.10.0
libtpu: 0.0.40
codegen_flags: <defaults>
</compile_context>

<pallas_src>
import functools

import jax
import jax.numpy as jnp
from jax import lax
from jax.experimental import pallas as pl
from jax.experimental.pallas import tpu as pltpu


def _style_loss_kernel(f_ref, t_ref, g_ref, loss_ref, acc_ref, *, scale, inv_mm):
    """Fused Gram matrix + weight scale + MSE-vs-target.

    f_ref   : (M, TC)  features tile (grid axis 0 walks the C reduction)
    t_ref   : (M, M)   target Gram (already weight-scaled, as in StyleLoss.__init__)
    g_ref   : (M, M)   output: G = weight * (F F^T) / (a*b*c)
    loss_ref: (1, 1)   output: mean((G - target)^2)
    acc_ref : (M, M)   f32 accumulator scratch, resident across the reduction axis
    """
    k = pl.program_id(0)

    @pl.when(k == 0)
    def _():
        acc_ref[...] = jnp.zeros_like(acc_ref)

    f = f_ref[...].astype(jnp.float32)
    # Partial F @ F^T over this C tile: contract dim 1 of both operands (MXU).
    acc_ref[...] += lax.dot_general(
        f, f, (((1,), (1,)), ((), ())), preferred_element_type=jnp.float32)

    @pl.when(k == pl.num_programs(0) - 1)
    def _():
        g = acc_ref[...] * scale                      # fold weight/(a*b*c) once
        g_ref[...] = g.astype(g_ref.dtype)
        d = g - t_ref[...].astype(jnp.float32)
        sq = d * d
        # Keep the reduction in the vector domain; (1,1) block equals full dims.
        loss_ref[...] = jnp.sum(
            jnp.sum(sq, axis=1, keepdims=True), axis=0, keepdims=True) * inv_mm


def style_loss_forward(x, target, weight):
    """x: (a, b, c) float32; target: (a*b, a*b) float32 (already *weight).

    Returns (output, G, loss) mirroring StyleLoss.forward's (return value,
    self.G, self.loss).
    """
    a, b, c = x.shape
    m = a * b
    features = x.reshape(m, c)

    # Reduction tile over c: biggest lane-aligned tile (<=512) that divides c;
    # fall back to the full, untiled extent when c is not 128-aligned.
    if c % 128 == 0:
        tc = 512
        while c % tc != 0:
            tc //= 2
    else:
        tc = c
    grid_k = c // tc

    scale = float(weight) / float(a * b * c)
    inv_mm = 1.0 / float(m * m)

    kernel = functools.partial(_style_loss_kernel, scale=scale, inv_mm=inv_mm)

    g, loss = pl.pallas_call(
        kernel,
        out_shape=(
            jax.ShapeDtypeStruct((m, m), jnp.float32),
            jax.ShapeDtypeStruct((1, 1), jnp.float32),
        ),
        grid_spec=pltpu.PrefetchScalarGridSpec(
            num_scalar_prefetch=0,
            grid=(grid_k,),
            in_specs=[
                pl.BlockSpec((m, tc), lambda k: (0, k)),   # features C-tile
                pl.BlockSpec((m, m), lambda k: (0, 0)),    # target (resident)
            ],
            out_specs=(
                pl.BlockSpec((m, m), lambda k: (0, 0)),    # G (resident, finalize)
                pl.BlockSpec((1, 1), lambda k: (0, 0)),    # loss scalar
            ),
            scratch_shapes=[pltpu.VMEM((m, m), jnp.float32)],
        ),
        compiler_params=pltpu.CompilerParams(
            # Single axis is the Gram reduction -> must be "arbitrary".
            # TODO(synk): for very large a*b, add a parallel grid axis over row
            # tiles of G so v7x's second TensorCore gets work.
            dimension_semantics=("arbitrary",),
        ),
    )(features, target)

    # StyleLoss.forward returns the input unchanged (self.output = inp.clone()).
    output = x
    return output, g, loss[0, 0]


def _reference(x, target, weight):
    a, b, c = x.shape
    f = x.reshape(a * b, c)
    g = jnp.dot(f, f.T, precision=lax.Precision.HIGHEST) / (a * b * c)
    g = g * weight
    loss = jnp.mean((g - target) ** 2)
    return x, g, loss


if __name__ == "__main__":
    key = jax.random.PRNGKey(0)
    k_x, k_t = jax.random.split(key)

    # Small 3-D shapes consistent with GramMatrix's (a, b, c) input.
    A, B, C = 2, 4, 1024
    WEIGHT = 1000.0

    x = jax.random.normal(k_x, (A, B, C), dtype=jnp.float32)
    target_feats = jax.random.normal(k_t, (A, B, C), dtype=jnp.float32)

    # StyleLoss.__init__: self.target = GramMatrix()(target).detach() * weight
    tf = target_feats.reshape(A * B, C)
    target = (jnp.dot(tf, tf.T, precision=lax.Precision.HIGHEST)
              / (A * B * C)) * WEIGHT

    out, g, loss = style_loss_forward(x, target, WEIGHT)
    out, g, loss = jax.block_until_ready((out, g, loss))

    ref_out, ref_g, ref_loss = _reference(x, target, WEIGHT)
    assert out.shape == x.shape, out.shape
    assert g.shape == (A * B, A * B), g.shape
    assert jnp.allclose(out, ref_out), "pass-through output mismatch"
    assert jnp.allclose(g, ref_g, atol=1e-3, rtol=1e-4), "Gram matrix mismatch"
    assert jnp.allclose(loss, ref_loss, atol=1e-2, rtol=1e-3), "loss mismatch"

    print("KERNEL_OK")
</pallas_src>

<mosaic_0001>
module attributes {stable_mosaic.version = 11 : i64} {
  func.func @_style_loss_kernel(%arg0: i32, %arg1: memref<8x512xf32, #tpu.memory_space<vmem>>, %arg2: memref<8x8xf32, #tpu.memory_space<vmem>>, %arg3: memref<8x8xf32, #tpu.memory_space<vmem>>, %arg4: memref<1x1xf32, #tpu.memory_space<vmem>>, %arg5: memref<8x8xf32, #tpu.memory_space<vmem>>) attributes {dimension_semantics = [#tpu.dimension_semantics<arbitrary>], iteration_bounds = array<i64: 2>, scalar_prefetch = 0 : i64, scratch_operands = 1 : i64, tpu.core_type = #tpu.core_type<tc>, window_params = [{transform_indices = @transform_0, window_bounds = array<i64: 8, 512>}, {pipeline_mode = #tpu.pipeline_mode<synchronous>, transform_indices = @transform_1, window_bounds = array<i64: 8, 8>}, {pipeline_mode = #tpu.pipeline_mode<synchronous>, transform_indices = @transform_2, window_bounds = array<i64: 8, 8>}, {pipeline_mode = #tpu.pipeline_mode<synchronous>, transform_indices = @transform_3, window_bounds = array<i64: 1, 1>}]} {
    %c0_i32 = arith.constant 0 : i32
    %0 = arith.cmpi eq, %arg0, %c0_i32 : i32
    %1 = arith.extui %0 : i1 to i32
    %c0_i32_0 = arith.constant 0 : i32
    %2 = arith.cmpi ne, %1, %c0_i32_0 : i32
    scf.if %2 {
      %cst_7 = arith.constant 0.000000e+00 : f32
      %11 = vector.broadcast %cst_7 : f32 to vector<8x8xf32>
      %c0_8 = arith.constant 0 : index
      %c0_9 = arith.constant 0 : index
      %12 = vector.load %arg5[%c0_8, %c0_9] : memref<8x8xf32, #tpu.memory_space<vmem>>, vector<8x8xf32>
      tpu.vector_store %arg5[%c0_8, %c0_9], %11 {strides = array<i32>} : memref<8x8xf32, #tpu.memory_space<vmem>>, vector<8x8xf32>,
    } else {
    }
    %c0 = arith.constant 0 : index
    %c0_1 = arith.constant 0 : index
    %3 = vector.load %arg1[%c0, %c0_1] : memref<8x512xf32, #tpu.memory_space<vmem>>, vector<8x512xf32>
    %c0_2 = arith.constant 0 : index
    %c0_3 = arith.constant 0 : index
    %4 = vector.load %arg5[%c0_2, %c0_3] : memref<8x8xf32, #tpu.memory_space<vmem>>, vector<8x8xf32>
    %cst = arith.constant dense<0.000000e+00> : vector<8x8xf32>
    %5 = tpu.matmul %3, %3, %cst {dimension_numbers = #tpu.dot_dimension_numbers<[1], [1], [0], [0], [0, 0, 1, 0], [], []>} : vector<8x512xf32>, vector<8x512xf32>, vector<8x8xf32> -> vector<8x8xf32>
    %6 = arith.addf %4, %5 : vector<8x8xf32>
    %c0_4 = arith.constant 0 : index
    %c0_5 = arith.constant 0 : index
    %7 = vector.load %arg5[%c0_4, %c0_5] : memref<8x8xf32, #tpu.memory_space<vmem>>, vector<8x8xf32>
    tpu.vector_store %arg5[%c0_4, %c0_5], %6 {strides = array<i32>} : memref<8x8xf32, #tpu.memory_space<vmem>>, vector<8x8xf32>,
    %c1_i32 = arith.constant 1 : i32
    %8 = arith.cmpi eq, %arg0, %c1_i32 : i32
    %9 = arith.extui %8 : i1 to i32
    %c0_i32_6 = arith.constant 0 : i32
    %10 = arith.cmpi ne, %9, %c0_i32_6 : i32
    scf.if %10 {
      %c0_7 = arith.constant 0 : index
      %c0_8 = arith.constant 0 : index
      %11 = vector.load %arg5[%c0_7, %c0_8] : memref<8x8xf32, #tpu.memory_space<vmem>>, vector<8x8xf32>
      %cst_9 = arith.constant 0.122070313 : f32
      %12 = vector.broadcast %cst_9 : f32 to vector<8x8xf32>
      %13 = arith.mulf %11, %12 : vector<8x8xf32>
      %c0_10 = arith.constant 0 : index
      %c0_11 = arith.constant 0 : index
      %14 = vector.load %arg3[%c0_10, %c0_11] : memref<8x8xf32, #tpu.memory_space<vmem>>, vector<8x8xf32>
      tpu.vector_store %arg3[%c0_10, %c0_11], %13 {strides = array<i32>} : memref<8x8xf32, #tpu.memory_space<vmem>>, vector<8x8xf32>,
      %c0_12 = arith.constant 0 : index
      %c0_13 = arith.constant 0 : index
      %15 = vector.load %arg2[%c0_12, %c0_13] : memref<8x8xf32, #tpu.memory_space<vmem>>, vector<8x8xf32>
      %16 = arith.subf %13, %15 : vector<8x8xf32>
      %17 = arith.mulf %16, %16 : vector<8x8xf32>
      %cst_14 = arith.constant dense<0.000000e+00> : vector<8xf32>
      %18 = vector.multi_reduction <add>, %17, %cst_14 [1] : vector<8x8xf32> to vector<8xf32>
      %19 = vector.shape_cast %18 : vector<8xf32> to vector<8x1xf32>
      %cst_15 = arith.constant dense<0.000000e+00> : vector<1xf32>
      %20 = vector.multi_reduction <add>, %19, %cst_15 [0] : vector<8x1xf32> to vector<1xf32>
      %21 = vector.shape_cast %20 : vector<1xf32> to vector<1x1xf32>
      %cst_16 = arith.constant 1.562500e-02 : f32
      %22 = vector.broadcast %cst_16 : f32 to vector<1x1xf32>
      %23 = arith.mulf %21, %22 : vector<1x1xf32>
      %c0_17 = arith.constant 0 : index
      %c0_18 = arith.constant 0 : index
      %24 = vector.load %arg4[%c0_17, %c0_18] : memref<1x1xf32, #tpu.memory_space<vmem>>, vector<1x1xf32>
      tpu.vector_store %arg4[%c0_17, %c0_18], %23 {strides = array<i32>} : memref<1x1xf32, #tpu.memory_space<vmem>>, vector<1x1xf32>,
    } else {
    }
    return
  }
  func.func @transform_0(%arg0: i32) -> (i32, i32) {
    %c0_i32 = arith.constant 0 : i32
    %c0_i32_0 = arith.constant 0 : i32
    return %c0_i32, %arg0 : i32, i32
  }
  func.func @transform_1(%arg0: i32) -> (i32, i32) {
    %c0_i32 = arith.constant 0 : i32
    %c0_i32_0 = arith.constant 0 : i32
    %c0_i32_1 = arith.constant 0 : i32
    return %c0_i32, %c0_i32_0 : i32, i32
  }
  func.func @transform_2(%arg0: i32) -> (i32, i32) {
    %c0_i32 = arith.constant 0 : i32
    %c0_i32_0 = arith.constant 0 : i32
    %c0_i32_1 = arith.constant 0 : i32
    return %c0_i32, %c0_i32_0 : i32, i32
  }
  func.func @transform_3(%arg0: i32) -> (i32, i32) {
    %c0_i32 = arith.constant 0 : i32
    %c0_i32_0 = arith.constant 0 : i32
    %c0_i32_1 = arith.constant 0 : i32
    return %c0_i32, %c0_i32_0 : i32, i32
  }
}

</mosaic_0001>

<llo_original>
// kernel: tpu_custom_call.1
$region0: #{tpu_custom_call.1}
  #allocation0 [shape = 'u32[]', space=smem, size = 0x4, offset = 0x4, fixed_abs, tag = 'smem constant byte address 0x4 - core index']
  #allocation1 [shape = 'u32[144,128]{1,0:T(1,128)}', space=vmem, size = 0x12000, scoped, tag = 'internal scratch']
  #allocation2 [shape = 'f32[8,8]{1,0:T(8,128)}', space=vmem, size = 0x1000, scoped, tag = 'scratch operand']
  %s0 = inlined_call_operand.hbm [shape: f32[8,1024], index: 0, kind: input, shape index: {}]
  %s1 = inlined_call_operand.hbm [shape: f32[8,8], index: 1, kind: input, shape index: {}]
  %s2 = inlined_call_operand.hbm [shape: f32[8,8], index: 2, kind: output, shape index: {0}]
  %s3 = inlined_call_operand.hbm [shape: f32[1,1], index: 3, kind: output, shape index: {1}]
  %4 = xla_tuple %s2, %s3
  %s5 = sld [smem:[#allocation0]]
  $region65: #{tpu_custom_call.1} parent=0
    _
  %s7 = ssub.s32 1, %s5
  %s8 = scalar_select 0, %s7, %s5
  $region1: #{tpu_custom_call.1} parent=0
    #allocation3 [shape = 'u8[32768]{0}', space=vmem, size = 0x8000, scoped, tag = 'input window, operand 0']
    #allocation4 [shape = 's32[2]{0}', space=sflag, size = 0x8, scoped, tag = 'scoped memory for tpu_custom_call.1']
    #allocation5 [shape = 's32[2]{0}', space=sflag, size = 0x8, scoped, tag = 'scoped memory for tpu_custom_call.1']
    #allocation6 [shape = 'u8[4096]{0}', space=vmem, size = 0x1000, scoped, tag = 'input window, operand 1, single buffered']
    #allocation7 [shape = 's32[1]{0}', space=sflag, size = 0x4, scoped, tag = 'scoped memory for tpu_custom_call.1']
    #allocation8 [shape = 'u8[4096]{0}', space=vmem, size = 0x1000, scoped, tag = 'output window, operand 0, single buffered']
    #allocation9 [shape = 'u8[512]{0}', space=vmem, size = 0x400, scoped, tag = 'output window, operand 1, single buffered']
    #allocation10 [shape = 's32[1]{0}', space=sflag, size = 0x4, scoped, tag = 'scoped memory for tpu_custom_call.1']
    %9 = vsyncpa [#allocation4], 0
    %s10 = scalar_lea.sflag [#allocation4], 1
    %11 = vsyncpa %s10, 0
    %12 = vsyncpa [#allocation7], 0
    %13 = vsyncpa [#allocation5], 0
    %14 = vsyncpa [#allocation10], 0
    loop: start=0, step=1, limit=4
    $region2: #{tpu_custom_call.1} parent=1 // loop_pre_header
      _
    $region3: #{tpu_custom_call.1} parent=1 // loop_header
      %s16 = sphi 0, %s20
      %p17 = scmp.ge.s32.totalorder %s16, 4
      %s26 = sphi 0, %s28
      %s29 = sphi 0, %s26
      %s30 = sphi 0, %s29
      %s46 = sphi 0, %s30
      %s50 = sphi 0, %s50
      %s52 = sphi 0, %s50
      %s53 = sphi 0, %s52
      %s67 = sphi 0, %s53
      %s71 = sphi 0, %s71
      %s73 = sphi 0, %s71
      %s74 = sphi 0, %s73
      %s88 = sphi 0, %s74
      %s92 = sphi 0, %s92
      %s94 = sphi 0, %s92
      %s95 = sphi 0, %s94
      %s109 = sphi 0, %s95
    $region4: #{tpu_custom_call.1} parent=1 // loop_header_branch
      %19 = sbr.rel (%p17) target = $region8
    $region5: #{tpu_custom_call.1} parent=1 // loop_body
      %s21 = ssub.s32 %s16, 1
      %s22 = ssub.s32 %s16, 2
      %s23 = sadd.s32 %s16, 1
      %s24 = ssub.s32 %s16, %s23
      %p25 = scmp.eq.s32.totalorder %s24, 0
      %s27 = sadd.s32 %s26, 1
      %s28 = scalar_select %p25, %s26, %s27
      %p31 = pneg %p25
      %p32 = scmp.eq.s32.totalorder %s16, 1
      %p33 = por %p31, %p32
      %p34 = scmp.ne.s32.totalorder %s26, %s29
      %p35 = scmp.eq.s32.totalorder %s16, 0
      %p36 = por %p34, %p35
      %p37 = scmp.ne.s32.totalorder %s26, %s29
      %p38 = scmp.eq.s32.totalorder %s21, 1
      %p39 = por %p37, %p38
      %p40 = scmp.ne.s32.totalorder %s29, %s30
      %p41 = scmp.eq.s32.totalorder %s21, 0
      %p42 = por %p40, %p41
      %p43 = scmp.ne.s32.totalorder %s29, %s30
      %p44 = scmp.eq.s32.totalorder %s22, 1
      %p45 = por %p43, %p44
      %p47 = scmp.ne.s32.totalorder %s30, %s46
      %p48 = scmp.eq.s32.totalorder %s22, 0
      %p49 = por %p47, %p48
      %s51 = sadd.s32 %s50, 1
      %p54 = scmp.eq.s32.totalorder %s16, 1
      %p55 = scmp.ne.s32.totalorder %s50, %s52
      %p56 = scmp.eq.s32.totalorder %s16, 0
      %p57 = por %p55, %p56
      %p58 = scmp.ne.s32.totalorder %s50, %s52
      %p59 = scmp.eq.s32.totalorder %s21, 1
      %p60 = por %p58, %p59
      %p61 = scmp.ne.s32.totalorder %s52, %s53
      %p62 = scmp.eq.s32.totalorder %s21, 0
      %p63 = por %p61, %p62
      %p64 = scmp.ne.s32.totalorder %s52, %s53
      %p65 = scmp.eq.s32.totalorder %s22, 1
      %p66 = por %p64, %p65
      %p68 = scmp.ne.s32.totalorder %s53, %s67
      %p69 = scmp.eq.s32.totalorder %s22, 0
      %p70 = por %p68, %p69
      %s72 = sadd.s32 %s71, 1
      %p75 = scmp.eq.s32.totalorder %s16, 1
      %p76 = scmp.ne.s32.totalorder %s71, %s73
      %p77 = scmp.eq.s32.totalorder %s16, 0
      %p78 = por %p76, %p77
      %p79 = scmp.ne.s32.totalorder %s71, %s73
      %p80 = scmp.eq.s32.totalorder %s21, 1
      %p81 = por %p79, %p80
      %p82 = scmp.ne.s32.totalorder %s73, %s74
      %p83 = scmp.eq.s32.totalorder %s21, 0
      %p84 = por %p82, %p83
      %p85 = scmp.ne.s32.totalorder %s73, %s74
      %p86 = scmp.eq.s32.totalorder %s22, 1
      %p87 = por %p85, %p86
      %p89 = scmp.ne.s32.totalorder %s74, %s88
      %p90 = scmp.eq.s32.totalorder %s22, 0
      %p91 = por %p89, %p90
      %s93 = sadd.s32 %s92, 1
      %p96 = scmp.eq.s32.totalorder %s16, 1
      %p97 = scmp.ne.s32.totalorder %s92, %s94
      %p98 = scmp.eq.s32.totalorder %s16, 0
      %p99 = por %p97, %p98
      %p100 = scmp.ne.s32.totalorder %s92, %s94
      %p101 = scmp.eq.s32.totalorder %s21, 1
      %p102 = por %p100, %p101
      %p103 = scmp.ne.s32.totalorder %s94, %s95
      %p104 = scmp.eq.s32.totalorder %s21, 0
      %p105 = por %p103, %p104
      %p106 = scmp.ne.s32.totalorder %s94, %s95
      %p107 = scmp.eq.s32.totalorder %s22, 1
      %p108 = por %p106, %p107
      %p110 = scmp.ne.s32.totalorder %s95, %s109
      %p111 = scmp.eq.s32.totalorder %s22, 0
      %p112 = por %p110, %p111
      %p113 = scmp.le.s32.totalorder 1, %s16
      %p114 = scmp.lt.s32.totalorder %s16, 3
      %p115 = pnand %p113, %p114
      %p116 = pneg %p115
      // Predicated region
      $region9: #{tpu_custom_call.1} parent=5 // pred_check
        _
      $region10: #{tpu_custom_call.1} parent=5 // pred_check_branch
        %118 = sbr.rel (%p115) target = $region12
      $region11: #{tpu_custom_call.1} parent=5 // pred_region
        %s119 = ssub.s32 %s16, 1
        // Predicated region
        $region13: #{tpu_custom_call.1} parent=11 // pred_check
          %p120 = pneg %p63
        $region14: #{tpu_custom_call.1} parent=11 // pred_check_branch
          %122 = sbr.rel (%p120) target = $region16
        $region15: #{tpu_custom_call.1} parent=11 // pred_region
          %s124 = ssub.s32 128, 128
          %125 = vsyncadd [#allocation7], %s124
          %s127 = sshll.u32 [#allocation6], 4
          %s128 = int_to_ptr.vmem [resolvable:$true] %s127
          %130 = dma.hbm_to_vmem [thread:$0]  %s1, 128, %s128, [#allocation7]
        $region16: #{tpu_custom_call.1} parent=11 // pred_fallthru
          _
      $region12: #{tpu_custom_call.1} parent=5 // pred_fallthru
        _
      %p131 = scmp.lt.s32.totalorder %s16, 2
      // Predicated region
      $region17: #{tpu_custom_call.1} parent=5 // pred_check
        %p132 = pneg %p131
      $region18: #{tpu_custom_call.1} parent=5 // pred_check_branch
        %134 = sbr.rel (%p132) target = $region20
      $region19: #{tpu_custom_call.1} parent=5 // pred_region
        // Predicated region
        $region21: #{tpu_custom_call.1} parent=19 // pred_check
          %p135 = pneg %p36
        $region22: #{tpu_custom_call.1} parent=19 // pred_check_branch
          %137 = sbr.rel (%p135) target = $region24
        $region23: #{tpu_custom_call.1} parent=19 // pred_region
          %s138 = sand.u32 %s26, 1
          %s139 = scalar_lea.sflag [#allocation4], %s138
          %s140 = sand.u32 %s26, 1
          %s141 = smul.addr %s140, 32
          %s142 = scalar_lea.vmem [#allocation3], %s141
          %s143 = smul.u32 4, %s16
          %s145 = ssub.s32 512, 512
          %146 = vsyncadd %s139, %s145
          %s147 = smul.addr %s143, 128
          %s148 = scalar_lea.hbm %s0, %s147
          %s150 = sshll.u32 %s142, 4
          %s151 = int_to_ptr.vmem [resolvable:$true] %s150
          %153 = dma.hbm_to_vmem [thread:$0]  %s148, 512, %s151, %s139
        $region24: #{tpu_custom_call.1} parent=19 // pred_fallthru
          _
      $region20: #{tpu_custom_call.1} parent=5 // pred_fallthru
        _
      %p154 = scmp.le.s32.totalorder 1, %s16
      %p155 = scmp.lt.s32.totalorder %s16, 3
      %p156 = pnand %p154, %p155
      %p157 = pneg %p156
      // Predicated region
      $region25: #{tpu_custom_call.1} parent=5 // pred_check
        _
      $region26: #{tpu_custom_call.1} parent=5 // pred_check_branch
        %159 = sbr.rel (%p156) target = $region28
      $region27: #{tpu_custom_call.1} parent=5 // pred_region
        %s160 = ssub.s32 %s16, 1
        %s161 = sand.u32 %s29, 1
        %s162 = scalar_lea.sflag [#allocation4], %s161
        %s163 = sand.u32 %s29, 1
        %s164 = smul.addr %s163, 32
        %s165 = scalar_lea.vmem [#allocation3], %s164
        // Predicated region
        $region29: #{tpu_custom_call.1} parent=27 // pred_check
          %p166 = pneg %p42
        $region30: #{tpu_custom_call.1} parent=27 // pred_check_branch
          %168 = sbr.rel (%p166) target = $region32
        $region31: #{tpu_custom_call.1} parent=27 // pred_region
          %169 = dma.done %s162, 512
        $region32: #{tpu_custom_call.1} parent=27 // pred_fallthru
          _
        // Predicated region
        $region33: #{tpu_custom_call.1} parent=27 // pred_check
          %p170 = pneg %p63
        $region34: #{tpu_custom_call.1} parent=27 // pred_check_branch
          %172 = sbr.rel (%p170) target = $region36
        $region35: #{tpu_custom_call.1} parent=27 // pred_region
          %173 = dma.done [#allocation7], 128
        $region36: #{tpu_custom_call.1} parent=27 // pred_fallthru
          _
        %s174 = sand.u32 %s29, 1
        %s175 = scalar_lea.sflag [#allocation4], %s174
        %s176 = sand.u32 %s29, 1
        %s177 = smul.addr %s176, 32
        %s178 = scalar_lea.vmem [#allocation3], %s177
        %p179 = pneg %p42
        %p180 = pneg %p39
        %p181 = pneg %p63
        %p182 = pneg %p60
        %p183 = pneg %p84
        %p184 = pneg %p81
        %p185 = pneg %p105
        %p186 = pneg %p102
        %s187 = smul.u32 4, %s21
        %p188 = scmp.eq.s32.totalorder %s21, 0
        // Predicated region
        $region37: #{tpu_custom_call.1} parent=27 // pred_check
          %p189 = pneg %p188
        $region38: #{tpu_custom_call.1} parent=27 // pred_check_branch
          %191 = sbr.rel (%p189) target = $region40
        $region39: #{tpu_custom_call.1} parent=27 // pred_region
          %vm192 = vcmask 64512
          %193 = vst.msk [vmem:[#allocation2] sm:$0xff] %vm192, 0.0
        $region40: #{tpu_custom_call.1} parent=27 // pred_fallthru
          _
        %v194 = vld [vmem:[%s165] sm:$0xff]
        %v195 = vld [vmem:[%s165 + $0x8] sm:$0xff]
        %v196 = vld [vmem:[%s165 + $0x10] sm:$0xff]
        %v197 = vld [vmem:[%s165 + $0x18] sm:$0xff]
        %v198 = vld [vmem:[#allocation2] sm:$0xff]
        %199 = vmatprep.subr.mxu0 %v195
        %200 = vmatpush1.xpose.msra.mxu0 %v194
        %201 = vmatprep.subr.mxu0 0.0
        %202 = vmatpush1.xpose.msra.mxu0 0.0
        %203 = vmatprep.subr.mxu0 0.0
        %204 = vmatpush1.xpose.msra.mxu0 0.0
        %205 = vmatprep.subr.mxu0 0.0
        %206 = vmatpush1.xpose.msra.mxu0 0.0
        %207 = vmatprep.subr.mxu0 0.0
        %208 = vmatpush1.xpose.msra.mxu0 0.0
        %209 = vmatprep.subr.mxu0 0.0
        %210 = vmatpush1.xpose.msra.mxu0 0.0
        %211 = vmatprep.subr.mxu0 0.0
        %212 = vmatpush1.xpose.msra.mxu0 0.0
        %213 = vmatprep.subr.mxu0 0.0
        %214 = vmatpush1.xpose.msra.mxu0 0.0
        %215 = vmatprep.subr.mxu0 0.0
        %216 = vmatpush1.xpose.msra.mxu0 0.0
        %217 = vmatprep.subr.mxu0 0.0
        %218 = vmatpush1.xpose.msra.mxu0 0.0
        %219 = vmatprep.subr.mxu0 0.0
        %220 = vmatpush1.xpose.msra.mxu0 0.0
        %221 = vmatprep.subr.mxu0 0.0
        %222 = vmatpush1.xpose.msra.mxu0 0.0
        %223 = vmatprep.subr.mxu0 0.0
        %224 = vmatpush1.xpose.msra.mxu0 0.0
        %225 = vmatprep.subr.mxu0 0.0
        %226 = vmatpush1.xpose.msra.mxu0 0.0
        %227 = vmatprep.subr.mxu0 0.0
        %228 = vmatpush1.xpose.msra.mxu0 0.0
        %229 = vmatprep.subr.mxu0 0.0
        %230 = vmatpush1.xpose.msra.mxu0 0.0
        %231 = vmatprep.subr.mxu0 0.0
        %232 = vmatpush1.xpose.msra.mxu0 0.0
        %233 = vmatprep.subr.mxu0 0.0
        %234 = vmatpush1.xpose.msra.mxu0 0.0
        %235 = vmatprep.subr.mxu0 0.0
        %236 = vmatpush1.xpose.msra.mxu0 0.0
        %237 = vmatprep.subr.mxu0 0.0
        %238 = vmatpush1.xpose.msra.mxu0 0.0
        %239 = vmatprep.subr.mxu0 0.0
        %240 = vmatpush1.xpose.msra.mxu0 0.0
        %241 = vmatprep.subr.mxu0 0.0
        %242 = vmatpush1.xpose.msra.mxu0 0.0
        %243 = vmatprep.subr.mxu0 0.0
        %244 = vmatpush1.xpose.msra.mxu0 0.0
        %245 = vmatprep.subr.mxu0 0.0
        %246 = vmatpush1.xpose.msra.mxu0 0.0
        %247 = vmatprep.subr.mxu0 0.0
        %248 = vmatpush1.xpose.msra.mxu0 0.0
        %249 = vmatprep.subr.mxu0 0.0
        %250 = vmatpush1.xpose.msra.mxu0 0.0
        %251 = vmatprep.subr.mxu0 0.0
        %252 = vmatpush1.xpose.msra.mxu0 0.0
        %253 = vmatprep.subr.mxu0 0.0
        %254 = vmatpush1.xpose.msra.mxu0 0.0
        %255 = vmatprep.subr.mxu0 0.0
        %256 = vmatpush1.xpose.msra.mxu0 0.0
        %257 = vmatprep.subr.mxu0 0.0
        %258 = vmatpush1.xpose.msra.mxu0 0.0
        %259 = vmatprep.subr.mxu0 0.0
        %260 = vmatpush1.xpose.msra.mxu0 0.0
        %261 = vmatprep.subr.mxu0 0.0
        %262 = vmatpush1.xpose.msra.mxu0 0.0
        %263 = vmatprep.mubr.f32.mxu0 %v195
        %264 = vmatmul.mubr.f32.gmra.mrb[0].mxu0 %v194
        %v265 = vpop.f32.mrb[0].mxu0
        %v266 = vadd.f32 0.0, %v265
        %v267 = vpop.f32.mrb[0].mxu0
        %268 = vdwg.mxu0
        %269 = vmatprep.subr.mxu0 %v197
        %270 = vmatpush1.xpose.msra.mxu0 %v196
        %271 = vmatprep.subr.mxu0 0.0
        %272 = vmatpush1.xpose.msra.mxu0 0.0
        %273 = vmatprep.subr.mxu0 0.0
        %274 = vmatpush1.xpose.msra.mxu0 0.0
        %275 = vmatprep.subr.mxu0 0.0
        %276 = vmatpush1.xpose.msra.mxu0 0.0
        %277 = vmatprep.subr.mxu0 0.0
        %278 = vmatpush1.xpose.msra.mxu0 0.0
        %279 = vmatprep.subr.mxu0 0.0
        %280 = vmatpush1.xpose.msra.mxu0 0.0
        %281 = vmatprep.subr.mxu0 0.0
        %282 = vmatpush1.xpose.msra.mxu0 0.0
        %283 = vmatprep.subr.mxu0 0.0
        %284 = vmatpush1.xpose.msra.mxu0 0.0
        %285 = vmatprep.subr.mxu0 0.0
        %286 = vmatpush1.xpose.msra.mxu0 0.0
        %287 = vmatprep.subr.mxu0 0.0
        %288 = vmatpush1.xpose.msra.mxu0 0.0
        %289 = vmatprep.subr.mxu0 0.0
        %290 = vmatpush1.xpose.msra.mxu0 0.0
        %291 = vmatprep.subr.mxu0 0.0
        %292 = vmatpush1.xpose.msra.mxu0 0.0
        %293 = vmatprep.subr.mxu0 0.0
        %294 = vmatpush1.xpose.msra.mxu0 0.0
        %295 = vmatprep.subr.mxu0 0.0
        %296 = vmatpush1.xpose.msra.mxu0 0.0
        %297 = vmatprep.subr.mxu0 0.0
        %298 = vmatpush1.xpose.msra.mxu0 0.0
        %299 = vmatprep.subr.mxu0 0.0
        %300 = vmatpush1.xpose.msra.mxu0 0.0
        %301 = vmatprep.subr.mxu0 0.0
        %302 = vmatpush1.xpose.msra.mxu0 0.0
        %303 = vmatprep.subr.mxu0 0.0
        %304 = vmatpush1.xpose.msra.mxu0 0.0
        %305 = vmatprep.subr.mxu0 0.0
        %306 = vmatpush1.xpose.msra.mxu0 0.0
        %307 = vmatprep.subr.mxu0 0.0
        %308 = vmatpush1.xpose.msra.mxu0 0.0
        %309 = vmatprep.subr.mxu0 0.0
        %310 = vmatpush1.xpose.msra.mxu0 0.0
        %311 = vmatprep.subr.mxu0 0.0
        %312 = vmatpush1.xpose.msra.mxu0 0.0
        %313 = vmatprep.subr.mxu0 0.0
        %314 = vmatpush1.xpose.msra.mxu0 0.0
        %315 = vmatprep.subr.mxu0 0.0
        %316 = vmatpush1.xpose.msra.mxu0 0.0
        %317 = vmatprep.subr.mxu0 0.0
        %318 = vmatpush1.xpose.msra.mxu0 0.0
        %319 = vmatprep.subr.mxu0 0.0
        %320 = vmatpush1.xpose.msra.mxu0 0.0
        %321 = vmatprep.subr.mxu0 0.0
        %322 = vmatpush1.xpose.msra.mxu0 0.0
        %323 = vmatprep.subr.mxu0 0.0
        %324 = vmatpush1.xpose.msra.mxu0 0.0
        %325 = vmatprep.subr.mxu0 0.0
        %326 = vmatpush1.xpose.msra.mxu0 0.0
        %327 = vmatprep.subr.mxu0 0.0
        %328 = vmatpush1.xpose.msra.mxu0 0.0
        %329 = vmatprep.subr.mxu0 0.0
        %330 = vmatpush1.xpose.msra.mxu0 0.0
        %331 = vmatprep.subr.mxu0 0.0
        %332 = vmatpush1.xpose.msra.mxu0 0.0
        %333 = vmatprep.mubr.f32.mxu0 %v197
        %334 = vmatmul.mubr.f32.gmra.mrb[0].mxu0 %v196
        %v335 = vpop.f32.mrb[0].mxu0
        %v336 = vadd.f32 %v266, %v335
        %v337 = vpop.f32.mrb[0].mxu0
        %338 = vdwg.mxu0
        %v339 = vadd.f32 %v198, %v336
        %vm340 = vcmask 64512
        %341 = vst.msk [vmem:[#allocation2] sm:$0xff] %vm340, %v339
        %p342 = scmp.eq.s32.totalorder %s21, 1
        // Predicated region
        $region41: #{tpu_custom_call.1} parent=27 // pred_check
          %p343 = pneg %p342
        $region42: #{tpu_custom_call.1} parent=27 // pred_check_branch
          %345 = sbr.rel (%p343) target = $region44
        $region43: #{tpu_custom_call.1} parent=27 // pred_region
          %v346 = vld [vmem:[#allocation2] sm:$0xff]
          %v347 = vmul.f32 %v346, 0.12207031
          %348 = vst.msk [vmem:[#allocation8] sm:$0xff] %vm340, %v347
          %v349 = vld [vmem:[#allocation6] sm:$0xff]
          %v350 = vsub.f32 %v347, %v349
          %v351 = vmul.f32 %v350, %v350
          %v352 = vsel %vm340, %v351, 0.0
          %353 = vadd.xlane.f32.xlu0 %v352
          %v354 = vpop.xlane.xlu0 %353
          %v355 = vrot.slane %v354, 4
          %v356 = vadd.f32 %v354, %v355
          %v357 = vrot.slane %v356, 2
          %v358 = vadd.f32 %v356, %v357
          %v359 = vrot.slane %v358, 1
          %v360 = vadd.f32 %v358, %v359
          %v361 = vmul.f32 %v360, 0.015625
          %vm362 = vcmask 0
          %363 = vst.msk [vmem:[#allocation9] sm:$0x1] %vm362, %v361
        $region44: #{tpu_custom_call.1} parent=27 // pred_fallthru
          _
        // Predicated region
        $region45: #{tpu_custom_call.1} parent=27 // pred_check
          %p364 = pneg %p81
        $region46: #{tpu_custom_call.1} parent=27 // pred_check_branch
          %366 = sbr.rel (%p364) target = $region48
        $region47: #{tpu_custom_call.1} parent=27 // pred_region
          %s368 = ssub.s32 128, 128
          %369 = vsyncadd [#allocation5], %s368
          %s371 = sshll.u32 [#allocation8], 4
          %s372 = int_to_ptr.vmem [resolvable:$true] %s371
          %374 = dma.vmem_to_hbm [thread:$0]  %s372, 128, %s2, [#allocation5]
        $region48: #{tpu_custom_call.1} parent=27 // pred_fallthru
          _
        // Predicated region
        $region49: #{tpu_custom_call.1} parent=27 // pred_check
          %p375 = pneg %p102
        $region50: #{tpu_custom_call.1} parent=27 // pred_check_branch
          %377 = sbr.rel (%p375) target = $region52
        $region51: #{tpu_custom_call.1} parent=27 // pred_region
          %s379 = ssub.s32 16, 16
          %380 = vsyncadd [#allocation10], %s379
          %s382 = sshll.u32 [#allocation9], 4
          %s383 = int_to_ptr.vmem [resolvable:$true] %s382
          %385 = dma.vmem_to_hbm [thread:$0]  %s383, 16, %s3, [#allocation10]
        $region52: #{tpu_custom_call.1} parent=27 // pred_fallthru
          _
        // Predicated region
        $region53: #{tpu_custom_call.1} parent=27 // pred_check
          %p386 = pneg %p81
        $region54: #{tpu_custom_call.1} parent=27 // pred_check_branch
          %388 = sbr.rel (%p386) target = $region56
        $region55: #{tpu_custom_call.1} parent=27 // pred_region
          %389 = dma.done [#allocation5], 128
        $region56: #{tpu_custom_call.1} parent=27 // pred_fallthru
          _
        // Predicated region
        $region57: #{tpu_custom_call.1} parent=27 // pred_check
          %p390 = pneg %p102
        $region58: #{tpu_custom_call.1} parent=27 // pred_check_branch
          %392 = sbr.rel (%p390) target = $region60
        $region59: #{tpu_custom_call.1} parent=27 // pred_region
          %393 = dma.done [#allocation10], 16
        $region60: #{tpu_custom_call.1} parent=27 // pred_fallthru
          _
      $region28: #{tpu_custom_call.1} parent=5 // pred_fallthru
        _
      %p394 = scmp.le.s32.totalorder 2, %s16
      // Predicated region
      $region61: #{tpu_custom_call.1} parent=5 // pred_check
        %p395 = pneg %p394
      $region62: #{tpu_custom_call.1} parent=5 // pred_check_branch
        %397 = sbr.rel (%p395) target = $region64
      $region63: #{tpu_custom_call.1} parent=5 // pred_region
        %s398 = ssub.s32 %s16, 2
      $region64: #{tpu_custom_call.1} parent=5 // pred_fallthru
        _
    $region6: #{tpu_custom_call.1} parent=1 // loop_footer
      %s20 = sadd.s32 1, %s16
    $region7: #{tpu_custom_call.1} parent=1 // loop_footer_branch
      %15 = sbr.rel target = $region3
    $region8: #{tpu_custom_call.1} parent=1 // loop_exit
      _
    %399 = vsyncpa [#allocation4], 1
    %s400 = scalar_lea.sflag [#allocation4], 1
    %401 = vsyncpa %s400, 1
    %402 = vsyncpa [#allocation7], 1
    %403 = vsyncpa [#allocation5], 1
    %s404 = scalar_lea.sflag [#allocation5], 1
    %405 = vsyncpa %s404, 1
    %406 = vsyncpa [#allocation10], 1

</llo_original>
